<compile_context>
chip_gen: v5e
topology: v5e:2x2
jax: 0.10.0
libtpu: 0.0.40
codegen_flags: <defaults>
</compile_context>

<pallas_src>
import functools

import jax
import jax.numpy as jnp
from jax.experimental import pallas as pl
from jax.experimental.pallas import tpu as pltpu


def _cdiv(a, b):
    return -(-a // b)


def _round_up(x, m):
    return _cdiv(x, m) * m


def _vmem_capacity_bytes():
    try:
        return int(pltpu.get_tpu_info().vmem_capacity_bytes)
    except Exception:
        return 64 * 1024 * 1024  # conservative default (v7x-sized VMEM)


def _encoder_kernel(*refs, n_slabs, stride, n_taps, use_mxu, mxu_dtype):
    """One grid step = one (batch row, output-time tile).

    refs = (slab_0, ..., slab_{G-1}, w, out)
      slab_g: [1, stride, tile_t]  phase-deinterleaved input, tap group g
      w:      [G, C, stride]       filters grouped to match the slabs
      out:    [1, C, tile_t]       channels on sublanes, time on lanes
    """
    slab_refs = refs[:n_slabs]
    w_ref = refs[n_slabs]
    o_ref = refs[n_slabs + 1]

    acc = None
    if use_mxu:
        # Realistic Conv-TasNet (stride >= 8): G contiguous [stride, tile_t]
        # slabs -> G small MXU dots, f32 accumulation.
        for g in range(n_slabs):
            wg = w_ref[g].astype(mxu_dtype)            # [C, stride]
            slab = slab_refs[g][0].astype(mxu_dtype)   # [stride, tile_t]
            d = jnp.dot(wg, slab, preferred_element_type=jnp.float32)
            acc = d if acc is None else acc + d
    else:
        # Tiny stride (e.g. the K=2 / stride=1 default): VPU broadcast-FMA,
        # one contiguous slab load per tap group, no zero-fill of acc.
        for g in range(n_slabs):
            wg = w_ref[g].astype(jnp.float32)          # [C, stride]
            slab = slab_refs[g][0].astype(jnp.float32)  # [stride, tile_t]
            for p in range(stride):
                if g * stride + p >= n_taps:
                    break
                term = wg[:, p:p + 1] * slab[p:p + 1, :]
                acc = term if acc is None else acc + term

    o_ref[0] = jnp.maximum(acc, 0.0).astype(o_ref.dtype)


def _plan_tiles(t_out, n_channels, out_itemsize, n_slabs, stride, in_itemsize,
                batch):
    """Lane-dense (multiple-of-128) time tile, generation-aware budget."""
    vmem = _vmem_capacity_bytes()
    big_vmem = vmem >= 100 * 1024 * 1024              # v5e / v6e (128 MiB)
    out_budget = (24 if big_vmem else 12) * 1024 * 1024
    vmem_limit = (64 if big_vmem else 40) * 1024 * 1024
    # Double-buffered bytes per output-lane element (input blocks sublane-pad
    # to >= 8 rows in VMEM).
    per_lane = 2 * (n_channels * out_itemsize
                    + n_slabs * max(stride, 8) * in_itemsize)
    tile = max(128, min(32768, out_budget // per_lane // 128 * 128))
    tile = min(tile, _round_up(t_out, 128))
    n_tiles = _cdiv(t_out, tile)
    # v7x has 2 TensorCores: keep at least 2 parallel grid steps when possible.
    if batch * n_tiles < 2 and t_out > 128:
        n_tiles = 2
    tile = _round_up(_cdiv(t_out, n_tiles), 128)
    n_tiles = _cdiv(t_out, tile)
    return tile, n_tiles, n_tiles * tile, vmem_limit


def encoder_forward(x, w, out_dtype=jnp.bfloat16):
    """Conv-TasNet Encoder forward.

    x: [B, T] waveform; w: [C, K] (nn.Conv1d weight [C, 1, K] squeezed).
    Returns relu(conv1d(x, w, stride=K//2)) as [B, C, T_out] in `out_dtype`
    (f32 accumulation inside the kernel; bf16 output by default because the
    kernel is HBM-store-bound at realistic sizes).
    """
    B, T = x.shape
    C, K = w.shape
    stride = max(1, K // 2)
    out_dtype = jnp.dtype(out_dtype)
    if T < K:
        raise ValueError(f"input length {T} is shorter than kernel_size {K}")
    t_out = (T - K) // stride + 1

    G = _cdiv(K, stride)  # tap groups (2 for the usual K = 2*stride)
    in_itemsize = jnp.dtype(x.dtype).itemsize
    tile_t, n_tiles, t_out_pad, vmem_limit = _plan_tiles(
        t_out, C, out_dtype.itemsize, G, stride, in_itemsize, B)

    # Phase-deinterleave in the wrapper: xs[b, p, f] = x[b, f*stride + p], so
    # tap k = g*stride + p of output position t reads xs[b, p, t + g].  Each
    # tap group g is then a contiguous [stride, t_out_pad] slab (no strided
    # lane loads, no in-kernel im2col concat).
    n_frames = t_out_pad + G - 1
    t_in = n_frames * stride
    x_pad = jnp.pad(x, ((0, 0), (0, max(0, t_in - T))))[:, :t_in]
    xs = x_pad.reshape(B, n_frames, stride).transpose(0, 2, 1)  # [B, stride, n_frames]
    slabs = [xs[:, :, g:g + t_out_pad] for g in range(G)]       # G x [B, stride, t_out_pad]

    # Group the filters to match the slabs: w_grp[g, c, p] = w[c, g*stride+p],
    # zero-padded so every group is full width.
    w_pad = jnp.pad(w, ((0, 0), (0, G * stride - K)))
    w_grp = w_pad.reshape(C, G, stride).transpose(1, 0, 2)      # [G, C, stride]

    use_mxu = stride >= 8
    half_out = out_dtype in (jnp.dtype(jnp.bfloat16), jnp.dtype(jnp.float16))
    mxu_dtype = jnp.bfloat16 if half_out else x.dtype

    kernel = functools.partial(
        _encoder_kernel, n_slabs=G, stride=stride, n_taps=K,
        use_mxu=use_mxu, mxu_dtype=mxu_dtype)

    cost = pl.CostEstimate(
        flops=2 * B * C * t_out * K,
        transcendentals=0,
        bytes_accessed=(B * G * stride * t_out_pad * in_itemsize
                        + G * C * stride * jnp.dtype(w.dtype).itemsize
                        + B * C * t_out_pad * out_dtype.itemsize),
    )

    in_specs = [pl.BlockSpec((1, stride, tile_t), lambda b, t: (b, 0, t))
                for _ in range(G)]
    in_specs.append(pl.BlockSpec((G, C, stride), lambda b, t: (0, 0, 0)))

    out = pl.pallas_call(
        kernel,
        out_shape=jax.ShapeDtypeStruct((B, C, t_out_pad), out_dtype),
        grid_spec=pltpu.PrefetchScalarGridSpec(
            num_scalar_prefetch=0,
            grid=(B, n_tiles),
            in_specs=in_specs,
            out_specs=pl.BlockSpec((1, C, tile_t), lambda b, t: (b, 0, t)),
        ),
        compiler_params=pltpu.CompilerParams(
            dimension_semantics=("parallel", "parallel"),
            vmem_limit_bytes=vmem_limit,
        ),
        cost_estimate=cost,
    )(*slabs, w_grp)

    if t_out_pad != t_out:
        # Padded tail positions computed ReLU of (possibly) boundary samples
        # and are simply discarded.
        out = out[:, :, :t_out]
    return out


def _encoder_ref(x, w):
    """Pure-JAX reference: Conv1d(stride=K//2, no bias) + ReLU."""
    C, K = w.shape
    stride = max(1, K // 2)
    T = x.shape[1]
    t_out = (T - K) // stride + 1
    idx = jnp.arange(t_out)[:, None] * stride + jnp.arange(K)[None, :]
    frames = x[:, idx]                                   # [B, t_out, K]
    return jnp.maximum(jnp.einsum("btk,ck->bct", frames, w), 0.0)


if __name__ == "__main__":
    key = jax.random.PRNGKey(0)
    kx, kw, kx2, kw2 = jax.random.split(key, 4)

    # --- Test 1: Encoder defaults of Dual_RNN_model (K=2, stride=1, C=64) ---
    B, T, C, K = 2, 256, 64, 2
    x = jax.random.normal(kx, (B, T), dtype=jnp.float32)
    w = 0.1 * jax.random.normal(kw, (C, K), dtype=jnp.float32)
    ref = _encoder_ref(x, w)

    out_f32 = jax.block_until_ready(encoder_forward(x, w, out_dtype=jnp.float32))
    assert out_f32.shape == ref.shape, out_f32.shape
    assert jnp.allclose(out_f32, ref, atol=1e-5, rtol=1e-5)

    out_bf16 = jax.block_until_ready(encoder_forward(x, w))  # bf16 default
    assert out_bf16.dtype == jnp.bfloat16
    assert out_bf16.shape == ref.shape
    assert jnp.allclose(out_bf16.astype(jnp.float32), ref, atol=5e-2, rtol=5e-2)

    # --- Test 2: realistic Conv-TasNet filterbank (K=16, stride=8), exercising
    #     the phase-deinterleaved MXU path. ---
    B2, T2, C2, K2 = 2, 2048, 64, 16
    x2 = jax.random.normal(kx2, (B2, T2), dtype=jnp.float32)
    w2 = 0.1 * jax.random.normal(kw2, (C2, K2), dtype=jnp.float32)
    ref2 = _encoder_ref(x2, w2)

    out2_f32 = jax.block_until_ready(
        encoder_forward(x2, w2, out_dtype=jnp.float32))
    assert out2_f32.shape == ref2.shape, out2_f32.shape
    assert jnp.allclose(out2_f32, ref2, atol=3e-2, rtol=3e-2)

    out2 = jax.block_until_ready(encoder_forward(x2, w2))  # bf16 default
    assert out2.shape == ref2.shape
    assert jnp.allclose(out2.astype(jnp.float32), ref2, atol=5e-2, rtol=5e-2)

    print("KERNEL_OK")
</pallas_src>

<mosaic_0001>
module attributes {stable_mosaic.version = 11 : i64} {
  func.func @_encoder_kernel(%arg0: i32, %arg1: i32, %arg2: memref<1x1x256xf32, #tpu.memory_space<vmem>>, %arg3: memref<1x1x256xf32, #tpu.memory_space<vmem>>, %arg4: memref<2x64x1xf32, #tpu.memory_space<vmem>>, %arg5: memref<1x64x256xf32, #tpu.memory_space<vmem>>) attributes {dimension_semantics = [#tpu.dimension_semantics<parallel>, #tpu.dimension_semantics<parallel>], iteration_bounds = array<i64: 2, 1>, scalar_prefetch = 0 : i64, scratch_operands = 0 : i64, tpu.core_type = #tpu.core_type<tc>, window_params = [{transform_indices = @transform_0, window_bounds = array<i64: 1, 1, 256>}, {transform_indices = @transform_1, window_bounds = array<i64: 1, 1, 256>}, {pipeline_mode = #tpu.pipeline_mode<synchronous>, transform_indices = @transform_2, window_bounds = array<i64: 2, 64, 1>}, {transform_indices = @transform_3, window_bounds = array<i64: 1, 64, 256>}]} {
    %c0 = arith.constant 0 : index
    %c0_0 = arith.constant 0 : index
    %c0_1 = arith.constant 0 : index
    %0 = vector.load %arg4[%c0, %c0_0, %c0_1] : memref<2x64x1xf32, #tpu.memory_space<vmem>>, vector<1x64x1xf32>
    %1 = vector.shape_cast %0 : vector<1x64x1xf32> to vector<64x1xf32>
    %c0_2 = arith.constant 0 : index
    %c0_3 = arith.constant 0 : index
    %c0_4 = arith.constant 0 : index
    %2 = vector.load %arg2[%c0_2, %c0_3, %c0_4] : memref<1x1x256xf32, #tpu.memory_space<vmem>>, vector<1x1x256xf32>
    %3 = vector.shape_cast %2 : vector<1x1x256xf32> to vector<1x256xf32>
    %4 = vector.broadcast %1 : vector<64x1xf32> to vector<64x256xf32>
    %5 = vector.broadcast %3 : vector<1x256xf32> to vector<64x256xf32>
    %6 = arith.mulf %4, %5 : vector<64x256xf32>
    %c1 = arith.constant 1 : index
    %c0_5 = arith.constant 0 : index
    %c0_6 = arith.constant 0 : index
    %7 = vector.load %arg4[%c1, %c0_5, %c0_6] : memref<2x64x1xf32, #tpu.memory_space<vmem>>, vector<1x64x1xf32>
    %8 = vector.shape_cast %7 : vector<1x64x1xf32> to vector<64x1xf32>
    %c0_7 = arith.constant 0 : index
    %c0_8 = arith.constant 0 : index
    %c0_9 = arith.constant 0 : index
    %9 = vector.load %arg3[%c0_7, %c0_8, %c0_9] : memref<1x1x256xf32, #tpu.memory_space<vmem>>, vector<1x1x256xf32>
    %10 = vector.shape_cast %9 : vector<1x1x256xf32> to vector<1x256xf32>
    %11 = vector.broadcast %8 : vector<64x1xf32> to vector<64x256xf32>
    %12 = vector.broadcast %10 : vector<1x256xf32> to vector<64x256xf32>
    %13 = arith.mulf %11, %12 : vector<64x256xf32>
    %14 = arith.addf %6, %13 : vector<64x256xf32>
    %cst = arith.constant 0.000000e+00 : f32
    %15 = vector.broadcast %cst : f32 to vector<64x256xf32>
    %16 = arith.maximumf %14, %15 : vector<64x256xf32>
    %c0_10 = arith.constant 0 : index
    %c0_11 = arith.constant 0 : index
    %c0_12 = arith.constant 0 : index
    %17 = vector.load %arg5[%c0_10, %c0_11, %c0_12] : memref<1x64x256xf32, #tpu.memory_space<vmem>>, vector<1x64x256xf32>
    %18 = vector.shape_cast %17 : vector<1x64x256xf32> to vector<64x256xf32>
    %19 = vector.shape_cast %16 : vector<64x256xf32> to vector<1x64x256xf32>
    tpu.vector_store %arg5[%c0_10, %c0_11, %c0_12], %19 {strides = array<i32>} : memref<1x64x256xf32, #tpu.memory_space<vmem>>, vector<1x64x256xf32>,
    return
  }
  func.func @transform_0(%arg0: i32, %arg1: i32) -> (i32, i32, i32) {
    %c0_i32 = arith.constant 0 : i32
    %c0_i32_0 = arith.constant 0 : i32
    return %arg0, %c0_i32, %arg1 : i32, i32, i32
  }
  func.func @transform_1(%arg0: i32, %arg1: i32) -> (i32, i32, i32) {
    %c0_i32 = arith.constant 0 : i32
    %c0_i32_0 = arith.constant 0 : i32
    return %arg0, %c0_i32, %arg1 : i32, i32, i32
  }
  func.func @transform_2(%arg0: i32, %arg1: i32) -> (i32, i32, i32) {
    %c0_i32 = arith.constant 0 : i32
    %c0_i32_0 = arith.constant 0 : i32
    %c0_i32_1 = arith.constant 0 : i32
    %c0_i32_2 = arith.constant 0 : i32
    return %c0_i32, %c0_i32_0, %c0_i32_1 : i32, i32, i32
  }
  func.func @transform_3(%arg0: i32, %arg1: i32) -> (i32, i32, i32) {
    %c0_i32 = arith.constant 0 : i32
    %c0_i32_0 = arith.constant 0 : i32
    return %arg0, %c0_i32, %arg1 : i32, i32, i32
  }
}

</mosaic_0001>

<llo_original>
// kernel: tpu_custom_call.1
$region0: #{tpu_custom_call.1}
  #allocation0 [shape = 'u32[]', space=smem, size = 0x4, offset = 0x4, fixed_abs, tag = 'smem constant byte address 0x4 - core index']
  #allocation1 [shape = 'u32[72,128]{1,0:T(1,128)}', space=vmem, size = 0x9000, scoped, tag = 'internal scratch']
  %s0 = inlined_call_operand.vmem [shape: f32[2,1,256], index: 0, kind: input, shape index: {}]
  %s1 = inlined_call_operand.vmem [shape: f32[2,1,256], index: 1, kind: input, shape index: {}]
  %s2 = inlined_call_operand.vmem [shape: f32[2,64,1], index: 2, kind: input, shape index: {}]
  %s3 = inlined_call_operand.hbm [shape: f32[2,64,256], index: 3, kind: output, shape index: {}]
  %s4 = sld [smem:[#allocation0]]
  $region45: #{tpu_custom_call.1} parent=0
    _
  %s6 = ssub.s32 1, %s4
  %s7 = scalar_select 0, %s6, %s4
  $region1: #{tpu_custom_call.1} parent=0
    #allocation2 [shape = 'u8[131072]{0}', space=vmem, size = 0x20000, scoped, tag = 'output window, operand 0']
    #allocation3 [shape = 's32[2]{0}', space=sflag, size = 0x8, scoped, tag = 'scoped memory for tpu_custom_call.1']
    %8 = vsyncpa [#allocation3], 0
    %s9 = scalar_lea.sflag [#allocation3], 1
    %10 = vsyncpa %s9, 0
    loop: start=0, step=1, limit=4
    $region2: #{tpu_custom_call.1} parent=1 // loop_pre_header
      _
    $region3: #{tpu_custom_call.1} parent=1 // loop_header
      %s12 = sphi 0, %s16
      %p13 = scmp.ge.s32.totalorder %s12, 4
      %s19 = sphi 0, %s31
      %s20 = sphi 0, %s27
      %s21 = sphi 0, %s19
      %s22 = sphi 0, %s20
      %s23 = sphi 0, %s21
      %s24 = sphi 0, %s22
      %s36 = sphi 0, %s38
      %s39 = sphi 0, %s36
      %s40 = sphi 0, %s39
      %s56 = sphi 0, %s40
      %s64 = sphi 0, %s66
      %s67 = sphi 0, %s64
      %s68 = sphi 0, %s67
      %s84 = sphi 0, %s68
      %s88 = sphi 0, %s88
      %s90 = sphi 0, %s88
      %s91 = sphi 0, %s90
      %s105 = sphi 0, %s91
      %s113 = sphi 0, %s115
      %s116 = sphi 0, %s113
      %s117 = sphi 0, %s116
      %s133 = sphi 0, %s117
    $region4: #{tpu_custom_call.1} parent=1 // loop_header_branch
      %15 = sbr.rel (%p13) target = $region8
    $region5: #{tpu_custom_call.1} parent=1 // loop_body
      %s17 = ssub.s32 %s12, 1
      %s18 = ssub.s32 %s12, 2
      %s25 = sadd.s32 1, %s20
      %p26 = scmp.ge.s32.totalorder %s25, 1
      %s27 = scalar_select %p26, 0, %s25
      %s28 = sadd.s32 1, %s19
      %s29 = scalar_select %p26, %s28, %s19
      %p30 = scmp.ge.s32.totalorder %s29, 2
      %s31 = scalar_select %p30, 0, %s29
      %s32 = ssub.s32 %s19, %s31
      %s33 = ssub.s32 %s20, %s27
      %s34 = sor.u32 %s32, %s33
      %p35 = scmp.eq.s32.totalorder %s34, 0
      %s37 = sadd.s32 %s36, 1
      %s38 = scalar_select %p35, %s36, %s37
      %p41 = pneg %p35
      %p42 = scmp.eq.s32.totalorder %s12, 1
      %p43 = por %p41, %p42
      %p44 = scmp.ne.s32.totalorder %s36, %s39
      %p45 = scmp.eq.s32.totalorder %s12, 0
      %p46 = por %p44, %p45
      %p47 = scmp.ne.s32.totalorder %s36, %s39
      %p48 = scmp.eq.s32.totalorder %s17, 1
      %p49 = por %p47, %p48
      %p50 = scmp.ne.s32.totalorder %s39, %s40
      %p51 = scmp.eq.s32.totalorder %s17, 0
      %p52 = por %p50, %p51
      %p53 = scmp.ne.s32.totalorder %s39, %s40
      %p54 = scmp.eq.s32.totalorder %s18, 1
      %p55 = por %p53, %p54
      %p57 = scmp.ne.s32.totalorder %s40, %s56
      %p58 = scmp.eq.s32.totalorder %s18, 0
      %p59 = por %p57, %p58
      %s60 = ssub.s32 %s19, %s31
      %s61 = ssub.s32 %s20, %s27
      %s62 = sor.u32 %s60, %s61
      %p63 = scmp.eq.s32.totalorder %s62, 0
      %s65 = sadd.s32 %s64, 1
      %s66 = scalar_select %p63, %s64, %s65
      %p69 = pneg %p63
      %p70 = scmp.eq.s32.totalorder %s12, 1
      %p71 = por %p69, %p70
      %p72 = scmp.ne.s32.totalorder %s64, %s67
      %p73 = scmp.eq.s32.totalorder %s12, 0
      %p74 = por %p72, %p73
      %p75 = scmp.ne.s32.totalorder %s64, %s67
      %p76 = scmp.eq.s32.totalorder %s17, 1
      %p77 = por %p75, %p76
      %p78 = scmp.ne.s32.totalorder %s67, %s68
      %p79 = scmp.eq.s32.totalorder %s17, 0
      %p80 = por %p78, %p79
      %p81 = scmp.ne.s32.totalorder %s67, %s68
      %p82 = scmp.eq.s32.totalorder %s18, 1
      %p83 = por %p81, %p82
      %p85 = scmp.ne.s32.totalorder %s68, %s84
      %p86 = scmp.eq.s32.totalorder %s18, 0
      %p87 = por %p85, %p86
      %s89 = sadd.s32 %s88, 1
      %p92 = scmp.eq.s32.totalorder %s12, 1
      %p93 = scmp.ne.s32.totalorder %s88, %s90
      %p94 = scmp.eq.s32.totalorder %s12, 0
      %p95 = por %p93, %p94
      %p96 = scmp.ne.s32.totalorder %s88, %s90
      %p97 = scmp.eq.s32.totalorder %s17, 1
      %p98 = por %p96, %p97
      %p99 = scmp.ne.s32.totalorder %s90, %s91
      %p100 = scmp.eq.s32.totalorder %s17, 0
      %p101 = por %p99, %p100
      %p102 = scmp.ne.s32.totalorder %s90, %s91
      %p103 = scmp.eq.s32.totalorder %s18, 1
      %p104 = por %p102, %p103
      %p106 = scmp.ne.s32.totalorder %s91, %s105
      %p107 = scmp.eq.s32.totalorder %s18, 0
      %p108 = por %p106, %p107
      %s109 = ssub.s32 %s19, %s31
      %s110 = ssub.s32 %s20, %s27
      %s111 = sor.u32 %s109, %s110
      %p112 = scmp.eq.s32.totalorder %s111, 0
      %s114 = sadd.s32 %s113, 1
      %s115 = scalar_select %p112, %s113, %s114
      %p118 = pneg %p112
      %p119 = scmp.eq.s32.totalorder %s12, 1
      %p120 = por %p118, %p119
      %p121 = scmp.ne.s32.totalorder %s113, %s116
      %p122 = scmp.eq.s32.totalorder %s12, 0
      %p123 = por %p121, %p122
      %p124 = scmp.ne.s32.totalorder %s113, %s116
      %p125 = scmp.eq.s32.totalorder %s17, 1
      %p126 = por %p124, %p125
      %p127 = scmp.ne.s32.totalorder %s116, %s117
      %p128 = scmp.eq.s32.totalorder %s17, 0
      %p129 = por %p127, %p128
      %p130 = scmp.ne.s32.totalorder %s116, %s117
      %p131 = scmp.eq.s32.totalorder %s18, 1
      %p132 = por %p130, %p131
      %p134 = scmp.ne.s32.totalorder %s117, %s133
      %p135 = scmp.eq.s32.totalorder %s18, 0
      %p136 = por %p134, %p135
      %p137 = scmp.le.s32.totalorder 1, %s12
      %p138 = scmp.lt.s32.totalorder %s12, 3
      %p139 = pnand %p137, %p138
      %p140 = pneg %p139
      // Predicated region
      $region9: #{tpu_custom_call.1} parent=5 // pred_check
        _
      $region10: #{tpu_custom_call.1} parent=5 // pred_check_branch
        %142 = sbr.rel (%p139) target = $region12
      $region11: #{tpu_custom_call.1} parent=5 // pred_region
        %s143 = ssub.s32 %s12, 1
        // Predicated region
        $region13: #{tpu_custom_call.1} parent=11 // pred_check
          %p144 = pneg %p101
        $region14: #{tpu_custom_call.1} parent=11 // pred_check_branch
          %146 = sbr.rel (%p144) target = $region16
        $region15: #{tpu_custom_call.1} parent=11 // pred_region
          _
        $region16: #{tpu_custom_call.1} parent=11 // pred_fallthru
          _
      $region12: #{tpu_custom_call.1} parent=5 // pred_fallthru
        _
      %p147 = scmp.lt.s32.totalorder %s12, 2
      // Predicated region
      $region17: #{tpu_custom_call.1} parent=5 // pred_check
        %p148 = pneg %p147
      $region18: #{tpu_custom_call.1} parent=5 // pred_check_branch
        %150 = sbr.rel (%p148) target = $region20
      $region19: #{tpu_custom_call.1} parent=5 // pred_region
        // Predicated region
        $region21: #{tpu_custom_call.1} parent=19 // pred_check
          %p151 = pneg %p46
        $region22: #{tpu_custom_call.1} parent=19 // pred_check_branch
          %153 = sbr.rel (%p151) target = $region24
        $region23: #{tpu_custom_call.1} parent=19 // pred_region
          %s154 = smul.u32 2, %s20
          %p155 = scmp.lt.s32.totalorder %s19, 1
          %s156 = scalar_select %p155, %s19, 1
          %p157 = scmp.lt.s32.totalorder %s154, 1
          %s158 = scalar_select %p157, %s154, 1
          %s159 = smul.addr %s156, 2
          %s160 = sadd.s32 %s158, %s159
          %s161 = scalar_lea.vmem %s0, %s160
          %s162 = smul.u32 2, %s20
        $region24: #{tpu_custom_call.1} parent=19 // pred_fallthru
          _
        // Predicated region
        $region25: #{tpu_custom_call.1} parent=19 // pred_check
          %p163 = pneg %p74
        $region26: #{tpu_custom_call.1} parent=19 // pred_check_branch
          %165 = sbr.rel (%p163) target = $region28
        $region27: #{tpu_custom_call.1} parent=19 // pred_region
          %s166 = smul.u32 2, %s20
          %p167 = scmp.lt.s32.totalorder %s19, 1
          %s168 = scalar_select %p167, %s19, 1
          %p169 = scmp.lt.s32.totalorder %s166, 1
          %s170 = scalar_select %p169, %s166, 1
          %s171 = smul.addr %s168, 2
          %s172 = sadd.s32 %s170, %s171
          %s173 = scalar_lea.vmem %s1, %s172
          %s174 = smul.u32 2, %s20
        $region28: #{tpu_custom_call.1} parent=19 // pred_fallthru
          _
      $region20: #{tpu_custom_call.1} parent=5 // pred_fallthru
        _
      %p175 = scmp.le.s32.totalorder 1, %s12
      %p176 = scmp.lt.s32.totalorder %s12, 3
      %p177 = pnand %p175, %p176
      %p178 = pneg %p177
      // Predicated region
      $region29: #{tpu_custom_call.1} parent=5 // pred_check
        _
      $region30: #{tpu_custom_call.1} parent=5 // pred_check_branch
        %180 = sbr.rel (%p177) target = $region32
      $region31: #{tpu_custom_call.1} parent=5 // pred_region
        %s181 = ssub.s32 %s12, 1
        %s182 = smul.u32 2, %s22
        %p183 = scmp.lt.s32.totalorder %s21, 1
        %s184 = scalar_select %p183, %s21, 1
        %p185 = scmp.lt.s32.totalorder %s182, 1
        %s186 = scalar_select %p185, %s182, 1
        %s187 = smul.addr %s184, 2
        %s188 = sadd.s32 %s186, %s187
        %s189 = scalar_lea.vmem %s0, %s188
        %p190 = pneg %p52
        %p191 = pneg %p49
        %s192 = smul.u32 2, %s22
        %p193 = scmp.lt.s32.totalorder %s21, 1
        %s194 = scalar_select %p193, %s21, 1
        %p195 = scmp.lt.s32.totalorder %s192, 1
        %s196 = scalar_select %p195, %s192, 1
        %s197 = smul.addr %s194, 2
        %s198 = sadd.s32 %s196, %s197
        %s199 = scalar_lea.vmem %s1, %s198
        %p200 = pneg %p80
        %p201 = pneg %p77
        %p202 = pneg %p101
        %p203 = pneg %p98
        %p204 = pneg %p129
        %p205 = pneg %p126
        %s206 = sand.u32 %s116, 1
        %s207 = scalar_lea.sflag [#allocation3], %s206
        %s208 = sand.u32 %s116, 1
        %s209 = smul.addr %s208, 128
        %s210 = scalar_lea.vmem [#allocation2], %s209
        %s211 = smul.u32 2, %s22
        %p212 = scmp.lt.s32.totalorder %s21, 1
        %s213 = scalar_select %p212, %s21, 1
        %p214 = scmp.lt.s32.totalorder %s211, 1
        %s215 = scalar_select %p214, %s211, 1
        %s216 = smul.addr %s213, 2
        %s217 = sadd.s32 %s215, %s216
        %s218 = scalar_lea.vmem %s0, %s217
        %s219 = smul.u32 2, %s22
        %s220 = smul.u32 2, %s22
        %p221 = scmp.lt.s32.totalorder %s21, 1
        %s222 = scalar_select %p221, %s21, 1
        %p223 = scmp.lt.s32.totalorder %s220, 1
        %s224 = scalar_select %p223, %s220, 1
        %s225 = smul.addr %s222, 2
        %s226 = sadd.s32 %s224, %s225
        %s227 = scalar_lea.vmem %s1, %s226
        %s228 = smul.u32 2, %s22
        %s229 = smul.u32 2, %s22
        %v230 = vld [vmem:[%s2] sm:$0xff]
        %v231 = vld [vmem:[%s2 + $0x8] sm:$0xff]
        %v232 = vld [vmem:[%s2 + $0x10] sm:$0xff]
        %v233 = vld [vmem:[%s2 + $0x18] sm:$0xff]
        %v234 = vld [vmem:[%s2 + $0x20] sm:$0xff]
        %v235 = vld [vmem:[%s2 + $0x28] sm:$0xff]
        %v236 = vld [vmem:[%s2 + $0x30] sm:$0xff]
        %v237 = vld [vmem:[%s2 + $0x38] sm:$0xff]
        %v238 = vld [vmem:[%s218] sm:$0x3]
        %240 = vset.pattern.permute.xlu0 0
        %241 = vperm.xlu0 %240, %v230
        %v242 = vpop.permute.xlu0 %241
        %245 = vset.pattern.permute.xlu0 0
        %246 = vperm.xlu0 %245, %v231
        %v247 = vpop.permute.xlu0 %246
        %250 = vset.pattern.permute.xlu0 0
        %251 = vperm.xlu0 %250, %v232
        %v252 = vpop.permute.xlu0 %251
        %255 = vset.pattern.permute.xlu0 0
        %256 = vperm.xlu0 %255, %v233
        %v257 = vpop.permute.xlu0 %256
        %260 = vset.pattern.permute.xlu0 0
        %261 = vperm.xlu0 %260, %v234
        %v262 = vpop.permute.xlu0 %261
        %265 = vset.pattern.permute.xlu0 0
        %266 = vperm.xlu0 %265, %v235
        %v267 = vpop.permute.xlu0 %266
        %270 = vset.pattern.permute.xlu0 0
        %271 = vperm.xlu0 %270, %v236
        %v272 = vpop.permute.xlu0 %271
        %275 = vset.pattern.permute.xlu0 0
        %276 = vperm.xlu0 %275, %v237
        %v277 = vpop.permute.xlu0 %276
        %v280 = vperm.slane %v238, 0
        %v281 = vperm.slane %v238, 1
        %v284 = vmul.f32 %v242, %v280
        %v285 = vmul.f32 %v242, %v281
        %v286 = vmul.f32 %v247, %v280
        %v287 = vmul.f32 %v247, %v281
        %v288 = vmul.f32 %v252, %v280
        %v289 = vmul.f32 %v252, %v281
        %v290 = vmul.f32 %v257, %v280
        %v291 = vmul.f32 %v257, %v281
        %v292 = vmul.f32 %v262, %v280
        %v293 = vmul.f32 %v262, %v281
        %v294 = vmul.f32 %v267, %v280
        %v295 = vmul.f32 %v267, %v281
        %v296 = vmul.f32 %v272, %v280
        %v297 = vmul.f32 %v272, %v281
        %v298 = vmul.f32 %v277, %v280
        %v299 = vmul.f32 %v277, %v281
        %s300 = scalar_lea.vmem %s2, 64
        %v301 = vld [vmem:[%s300] sm:$0xff]
        %v302 = vld [vmem:[%s300 + $0x8] sm:$0xff]
        %v303 = vld [vmem:[%s300 + $0x10] sm:$0xff]
        %v304 = vld [vmem:[%s300 + $0x18] sm:$0xff]
        %v305 = vld [vmem:[%s300 + $0x20] sm:$0xff]
        %v306 = vld [vmem:[%s300 + $0x28] sm:$0xff]
        %v307 = vld [vmem:[%s300 + $0x30] sm:$0xff]
        %v308 = vld [vmem:[%s300 + $0x38] sm:$0xff]
        %v309 = vld [vmem:[%s227] sm:$0x3]
        %311 = vset.pattern.permute.xlu0 0
        %312 = vperm.xlu0 %311, %v301
        %v313 = vpop.permute.xlu0 %312
        %316 = vset.pattern.permute.xlu0 0
        %317 = vperm.xlu0 %316, %v302
        %v318 = vpop.permute.xlu0 %317
        %321 = vset.pattern.permute.xlu0 0
        %322 = vperm.xlu0 %321, %v303
        %v323 = vpop.permute.xlu0 %322
        %326 = vset.pattern.permute.xlu0 0
        %327 = vperm.xlu0 %326, %v304
        %v328 = vpop.permute.xlu0 %327
        %331 = vset.pattern.permute.xlu0 0
        %332 = vperm.xlu0 %331, %v305
        %v333 = vpop.permute.xlu0 %332
        %336 = vset.pattern.permute.xlu0 0
        %337 = vperm.xlu0 %336, %v306
        %v338 = vpop.permute.xlu0 %337
        %341 = vset.pattern.permute.xlu0 0
        %342 = vperm.xlu0 %341, %v307
        %v343 = vpop.permute.xlu0 %342
        %346 = vset.pattern.permute.xlu0 0
        %347 = vperm.xlu0 %346, %v308
        %v348 = vpop.permute.xlu0 %347
        %v351 = vperm.slane %v309, 0
        %v352 = vperm.slane %v309, 1
        %v355 = vmul.f32 %v313, %v351
        %v356 = vmul.f32 %v313, %v352
        %v357 = vmul.f32 %v318, %v351
        %v358 = vmul.f32 %v318, %v352
        %v359 = vmul.f32 %v323, %v351
        %v360 = vmul.f32 %v323, %v352
        %v361 = vmul.f32 %v328, %v351
        %v362 = vmul.f32 %v328, %v352
        %v363 = vmul.f32 %v333, %v351
        %v364 = vmul.f32 %v333, %v352
        %v365 = vmul.f32 %v338, %v351
        %v366 = vmul.f32 %v338, %v352
        %v367 = vmul.f32 %v343, %v351
        %v368 = vmul.f32 %v343, %v352
        %v369 = vmul.f32 %v348, %v351
        %v370 = vmul.f32 %v348, %v352
        %v371 = vadd.f32 %v284, %v355
        %v372 = vadd.f32 %v285, %v356
        %v373 = vadd.f32 %v286, %v357
        %v374 = vadd.f32 %v287, %v358
        %v375 = vadd.f32 %v288, %v359
        %v376 = vadd.f32 %v289, %v360
        %v377 = vadd.f32 %v290, %v361
        %v378 = vadd.f32 %v291, %v362
        %v379 = vadd.f32 %v292, %v363
        %v380 = vadd.f32 %v293, %v364
        %v381 = vadd.f32 %v294, %v365
        %v382 = vadd.f32 %v295, %v366
        %v383 = vadd.f32 %v296, %v367
        %v384 = vadd.f32 %v297, %v368
        %v385 = vadd.f32 %v298, %v369
        %v386 = vadd.f32 %v299, %v370
        %v387 = vmax.f32 %v371, 0.0
        %v388 = vmax.f32 %v372, 0.0
        %v389 = vmax.f32 %v373, 0.0
        %v390 = vmax.f32 %v374, 0.0
        %v391 = vmax.f32 %v375, 0.0
        %v392 = vmax.f32 %v376, 0.0
        %v393 = vmax.f32 %v377, 0.0
        %v394 = vmax.f32 %v378, 0.0
        %v395 = vmax.f32 %v379, 0.0
        %v396 = vmax.f32 %v380, 0.0
        %v397 = vmax.f32 %v381, 0.0
        %v398 = vmax.f32 %v382, 0.0
        %v399 = vmax.f32 %v383, 0.0
        %v400 = vmax.f32 %v384, 0.0
        %v401 = vmax.f32 %v385, 0.0
        %v402 = vmax.f32 %v386, 0.0
        %403 = vst [vmem:[%s210] sm:$0xff] %v387
        %404 = vst [vmem:[%s210 + $0x8] sm:$0xff] %v388
        %405 = vst [vmem:[%s210 + $0x10] sm:$0xff] %v389
        %406 = vst [vmem:[%s210 + $0x18] sm:$0xff] %v390
        %407 = vst [vmem:[%s210 + $0x20] sm:$0xff] %v391
        %408 = vst [vmem:[%s210 + $0x28] sm:$0xff] %v392
        %409 = vst [vmem:[%s210 + $0x30] sm:$0xff] %v393
        %410 = vst [vmem:[%s210 + $0x38] sm:$0xff] %v394
        %411 = vst [vmem:[%s210 + $0x40] sm:$0xff] %v395
        %412 = vst [vmem:[%s210 + $0x48] sm:$0xff] %v396
        %413 = vst [vmem:[%s210 + $0x50] sm:$0xff] %v397
        %414 = vst [vmem:[%s210 + $0x58] sm:$0xff] %v398
        %415 = vst [vmem:[%s210 + $0x60] sm:$0xff] %v399
        %416 = vst [vmem:[%s210 + $0x68] sm:$0xff] %v400
        %417 = vst [vmem:[%s210 + $0x70] sm:$0xff] %v401
        %418 = vst [vmem:[%s210 + $0x78] sm:$0xff] %v402
        %s419 = sand.u32 %s116, 1
        %s420 = scalar_lea.sflag [#allocation3], %s419
        %s421 = sand.u32 %s116, 1
        %s422 = smul.addr %s421, 128
        %s423 = scalar_lea.vmem [#allocation2], %s422
        // Predicated region
        $region33: #{tpu_custom_call.1} parent=31 // pred_check
          %p424 = pneg %p126
        $region34: #{tpu_custom_call.1} parent=31 // pred_check_branch
          %426 = sbr.rel (%p424) target = $region36
        $region35: #{tpu_custom_call.1} parent=31 // pred_region
          %s427 = smul.u32 2, %s22
          %429 = vsyncadd %s420, 0
          %s430 = smul.addr %s21, 16
          %s431 = sadd.s32 %s427, %s430
          %s432 = smul.addr %s431, 8
          %s433 = scalar_lea.hbm %s3, %s432
          %s434 = sshll.u32 %s423, 4
          %s435 = int_to_ptr.vmem [resolvable:$true] %s434
          %s436 = sshll.u32 %s433, 4
          %s437 = int_to_ptr.hbm [resolvable:$true] %s436
          %442 = dma.vmem_to_hbm [thread:$0]  %s435, 2048, %s437, %s420, 256, 256, 16
        $region36: #{tpu_custom_call.1} parent=31 // pred_fallthru
          _
      $region32: #{tpu_custom_call.1} parent=5 // pred_fallthru
        _
      %p443 = scmp.le.s32.totalorder 2, %s12
      // Predicated region
      $region37: #{tpu_custom_call.1} parent=5 // pred_check
        %p444 = pneg %p443
      $region38: #{tpu_custom_call.1} parent=5 // pred_check_branch
        %446 = sbr.rel (%p444) target = $region40
      $region39: #{tpu_custom_call.1} parent=5 // pred_region
        %s447 = ssub.s32 %s12, 2
        // Predicated region
        $region41: #{tpu_custom_call.1} parent=39 // pred_check
          %p448 = pneg %p132
        $region42: #{tpu_custom_call.1} parent=39 // pred_check_branch
          %450 = sbr.rel (%p448) target = $region44
        $region43: #{tpu_custom_call.1} parent=39 // pred_region
          %s451 = sand.u32 %s117, 1
          %s452 = scalar_lea.sflag [#allocation3], %s451
          %s453 = sand.u32 %s117, 1
          %s454 = smul.addr %s453, 128
          %s455 = scalar_lea.vmem [#allocation2], %s454
          %457 = dma.done %s452, 2048
        $region44: #{tpu_custom_call.1} parent=39 // pred_fallthru
          _
      $region40: #{tpu_custom_call.1} parent=5 // pred_fallthru
        _
    $region6: #{tpu_custom_call.1} parent=1 // loop_footer
      %s16 = sadd.s32 1, %s12
    $region7: #{tpu_custom_call.1} parent=1 // loop_footer_branch
      %11 = sbr.rel target = $region3
    $region8: #{tpu_custom_call.1} parent=1 // loop_exit
      _
    %458 = vsyncpa [#allocation3], 1
    %s459 = scalar_lea.sflag [#allocation3], 1
    %460 = vsyncpa %s459, 1

</llo_original>
